<compile_context>
chip_gen: v6e
topology: v6e:2x2x1
jax: 0.10.0
libtpu: 0.0.40
codegen_flags: <defaults>
</compile_context>

<pallas_src>
import jax
import jax.numpy as jnp
from jax.experimental import pallas as pl
from jax.experimental.pallas import tpu as pltpu


def conv1x1_relu_kernel(x_ref, w_ref, b_ref, o_ref):
    # x_ref: (Cin, TL), w_ref: (Cout, Cin), b_ref: (Cout, 1), o_ref: (Cout, TL)
    y = jnp.dot(w_ref[...], x_ref[...], preferred_element_type=jnp.float32)
    y = y + b_ref[...]                       # broadcast (Cout, 1) over lanes
    o_ref[...] = jnp.maximum(y, 0.0).astype(o_ref.dtype)


def _choose_tile_l(L, max_tl=2048):
    """Lane tile: full L when small, else the largest multiple of 128 dividing L."""
    if L <= max_tl:
        return L
    for tl in (2048, 1024, 512, 256, 128):
        if L % tl == 0:
            return tl
    return L  # fallback: full-dim block


def conv1d_k1_relu(x_ncl, weight, bias):
    """x_ncl: (N, Cin, L) float32; weight: (Cout, Cin, 1); bias: (Cout,)."""
    N, Cin, L = x_ncl.shape
    Cout = weight.shape[0]

    w2d = weight[:, :, 0]                    # (Cout, Cin)
    b2d = bias.reshape(Cout, 1)              # (Cout, 1)

    TL = _choose_tile_l(L)
    grid_l = pl.cdiv(L, TL)

    itemsize = jnp.dtype(x_ncl.dtype).itemsize
    cost = pl.CostEstimate(
        flops=2 * N * L * Cin * Cout,
        transcendentals=0,
        bytes_accessed=(N * Cin * L + Cout * Cin + Cout + N * Cout * L) * itemsize,
    )

    out = pl.pallas_call(
        conv1x1_relu_kernel,
        out_shape=jax.ShapeDtypeStruct((N, Cout, L), x_ncl.dtype),
        grid_spec=pltpu.PrefetchScalarGridSpec(
            num_scalar_prefetch=0,
            grid=(N, grid_l),
            in_specs=[
                # x: batch dim squeezed; kernel sees (Cin, TL) with L on lanes.
                pl.BlockSpec((None, Cin, TL), lambda n, l: (n, 0, l)),
                # Weight / bias: constant block index -> stays resident in VMEM.
                pl.BlockSpec((Cout, Cin), lambda n, l: (0, 0)),
                pl.BlockSpec((Cout, 1), lambda n, l: (0, 0)),
            ],
            out_specs=pl.BlockSpec((None, Cout, TL), lambda n, l: (n, 0, l)),
        ),
        compiler_params=pltpu.CompilerParams(
            dimension_semantics=("parallel", "parallel"),
        ),
        cost_estimate=cost,
    )(x_ncl, w2d, b2d)

    return out


def reference(x_ncl, weight, bias):
    # Pure-JAX reference for a sanity check.
    y = jnp.einsum("ncl,oc->nol", x_ncl, weight[:, :, 0]) + bias[None, :, None]
    return jnp.maximum(y, 0.0)


if __name__ == "__main__":
    key = jax.random.PRNGKey(0)
    k_x, k_w, k_b = jax.random.split(key, 3)

    N, Cin, Cout, L = 2, 10, 20, 16
    x = jax.random.normal(k_x, (N, Cin, L), dtype=jnp.float32)
    # Deterministic parameter init (shapes match nn.Conv1d(10, 20, 1)).
    weight = jax.random.normal(k_w, (Cout, Cin, 1), dtype=jnp.float32) * 0.1
    bias = jax.random.normal(k_b, (Cout,), dtype=jnp.float32) * 0.1

    out = conv1d_k1_relu(x, weight, bias)
    out = jax.block_until_ready(out)

    ref = reference(x, weight, bias)
    assert out.shape == (N, Cout, L)
    assert jnp.allclose(out, ref, atol=1e-5, rtol=1e-5)

    print("KERNEL_OK")
</pallas_src>

<mosaic_0001>
module attributes {stable_mosaic.version = 11 : i64} {
  func.func @conv1x1_relu_kernel(%arg0: i32, %arg1: i32, %arg2: memref<1x10x16xf32, #tpu.memory_space<vmem>>, %arg3: memref<20x10xf32, #tpu.memory_space<vmem>>, %arg4: memref<20x1xf32, #tpu.memory_space<vmem>>, %arg5: memref<1x20x16xf32, #tpu.memory_space<vmem>>) attributes {dimension_semantics = [#tpu.dimension_semantics<parallel>, #tpu.dimension_semantics<parallel>], iteration_bounds = array<i64: 2, 1>, scalar_prefetch = 0 : i64, scratch_operands = 0 : i64, tpu.core_type = #tpu.core_type<tc>, window_params = [{transform_indices = @transform_0, window_bounds = array<i64: 1, 10, 16>}, {pipeline_mode = #tpu.pipeline_mode<synchronous>, transform_indices = @transform_1, window_bounds = array<i64: 20, 10>}, {pipeline_mode = #tpu.pipeline_mode<synchronous>, transform_indices = @transform_2, window_bounds = array<i64: 20, 1>}, {transform_indices = @transform_3, window_bounds = array<i64: 1, 20, 16>}]} {
    %c0 = arith.constant 0 : index
    %c0_0 = arith.constant 0 : index
    %0 = vector.load %arg3[%c0, %c0_0] : memref<20x10xf32, #tpu.memory_space<vmem>>, vector<20x10xf32>
    %c0_1 = arith.constant 0 : index
    %c0_2 = arith.constant 0 : index
    %c0_3 = arith.constant 0 : index
    %1 = vector.load %arg2[%c0_1, %c0_2, %c0_3] : memref<1x10x16xf32, #tpu.memory_space<vmem>>, vector<1x10x16xf32>
    %2 = vector.shape_cast %1 : vector<1x10x16xf32> to vector<10x16xf32>
    %cst = arith.constant dense<0.000000e+00> : vector<20x16xf32>
    %3 = tpu.matmul %0, %2, %cst {dimension_numbers = #tpu.dot_dimension_numbers<[1], [0], [0], [1], [0, 0, 1, 1], [], []>} : vector<20x10xf32>, vector<10x16xf32>, vector<20x16xf32> -> vector<20x16xf32>
    %c0_4 = arith.constant 0 : index
    %c0_5 = arith.constant 0 : index
    %4 = vector.load %arg4[%c0_4, %c0_5] : memref<20x1xf32, #tpu.memory_space<vmem>>, vector<20x1xf32>
    %5 = vector.broadcast %4 : vector<20x1xf32> to vector<20x16xf32>
    %6 = arith.addf %3, %5 : vector<20x16xf32>
    %cst_6 = arith.constant 0.000000e+00 : f32
    %7 = vector.broadcast %cst_6 : f32 to vector<20x16xf32>
    %8 = arith.maximumf %6, %7 : vector<20x16xf32>
    %c0_7 = arith.constant 0 : index
    %c0_8 = arith.constant 0 : index
    %c0_9 = arith.constant 0 : index
    %9 = vector.load %arg5[%c0_7, %c0_8, %c0_9] : memref<1x20x16xf32, #tpu.memory_space<vmem>>, vector<1x20x16xf32>
    %10 = vector.shape_cast %9 : vector<1x20x16xf32> to vector<20x16xf32>
    %11 = vector.shape_cast %8 : vector<20x16xf32> to vector<1x20x16xf32>
    tpu.vector_store %arg5[%c0_7, %c0_8, %c0_9], %11 {strides = array<i32>} : memref<1x20x16xf32, #tpu.memory_space<vmem>>, vector<1x20x16xf32>,
    return
  }
  func.func @transform_0(%arg0: i32, %arg1: i32) -> (i32, i32, i32) {
    %c0_i32 = arith.constant 0 : i32
    %c0_i32_0 = arith.constant 0 : i32
    return %arg0, %c0_i32, %arg1 : i32, i32, i32
  }
  func.func @transform_1(%arg0: i32, %arg1: i32) -> (i32, i32) {
    %c0_i32 = arith.constant 0 : i32
    %c0_i32_0 = arith.constant 0 : i32
    %c0_i32_1 = arith.constant 0 : i32
    return %c0_i32, %c0_i32_0 : i32, i32
  }
  func.func @transform_2(%arg0: i32, %arg1: i32) -> (i32, i32) {
    %c0_i32 = arith.constant 0 : i32
    %c0_i32_0 = arith.constant 0 : i32
    %c0_i32_1 = arith.constant 0 : i32
    return %c0_i32, %c0_i32_0 : i32, i32
  }
  func.func @transform_3(%arg0: i32, %arg1: i32) -> (i32, i32, i32) {
    %c0_i32 = arith.constant 0 : i32
    %c0_i32_0 = arith.constant 0 : i32
    return %arg0, %c0_i32, %arg1 : i32, i32, i32
  }
}

</mosaic_0001>

<llo_original>
// kernel: tpu_custom_call.1
$region0: #{tpu_custom_call.1}
  #allocation0 [shape = 'u32[]', space=smem, size = 0x4, offset = 0x4, fixed_abs, tag = 'smem constant byte address 0x4 - core index']
  #allocation1 [shape = 'u32[144,128]{1,0:T(1,128)}', space=vmem, size = 0x12000, scoped, tag = 'internal scratch']
  %s0 = inlined_call_operand.vmem [shape: f32[2,10,16], index: 0, kind: input, shape index: {}]
  %s1 = inlined_call_operand.vmem [shape: f32[20,10], index: 1, kind: input, shape index: {}]
  %s2 = inlined_call_operand.vmem [shape: f32[20,1], index: 2, kind: input, shape index: {}]
  %s3 = inlined_call_operand.vmem [shape: f32[2,20,16], index: 3, kind: output, shape index: {}]
  %s4 = sld [smem:[#allocation0]]
  $region45: #{tpu_custom_call.1} parent=0
    _
  %s6 = ssub.s32 1, %s4
  %s7 = scalar_select 0, %s6, %s4
  loop: start=0, step=1, limit=4
  $region2: #{tpu_custom_call.1} parent=0 // loop_pre_header
    _
  $region3: #{tpu_custom_call.1} parent=0 // loop_header
    %s9 = sphi 0, %s13
    %p10 = scmp.ge.s32.totalorder %s9, 4
    %s16 = sphi 0, %s28
    %s17 = sphi 0, %s24
    %s18 = sphi 0, %s16
    %s19 = sphi 0, %s17
    %s20 = sphi 0, %s18
    %s21 = sphi 0, %s19
    %s33 = sphi 0, %s35
    %s36 = sphi 0, %s33
    %s37 = sphi 0, %s36
    %s53 = sphi 0, %s37
    %s57 = sphi 0, %s57
    %s59 = sphi 0, %s57
    %s60 = sphi 0, %s59
    %s74 = sphi 0, %s60
    %s78 = sphi 0, %s78
    %s80 = sphi 0, %s78
    %s81 = sphi 0, %s80
    %s95 = sphi 0, %s81
    %s103 = sphi 0, %s105
    %s106 = sphi 0, %s103
    %s107 = sphi 0, %s106
    %s123 = sphi 0, %s107
  $region4: #{tpu_custom_call.1} parent=0 // loop_header_branch
    %12 = sbr.rel (%p10) target = $region8
  $region5: #{tpu_custom_call.1} parent=0 // loop_body
    %s14 = ssub.s32 %s9, 1
    %s15 = ssub.s32 %s9, 2
    %s22 = sadd.s32 1, %s17
    %p23 = scmp.ge.s32.totalorder %s22, 1
    %s24 = scalar_select %p23, 0, %s22
    %s25 = sadd.s32 1, %s16
    %s26 = scalar_select %p23, %s25, %s16
    %p27 = scmp.ge.s32.totalorder %s26, 2
    %s28 = scalar_select %p27, 0, %s26
    %s29 = ssub.s32 %s16, %s28
    %s30 = ssub.s32 %s17, %s24
    %s31 = sor.u32 %s29, %s30
    %p32 = scmp.eq.s32.totalorder %s31, 0
    %s34 = sadd.s32 %s33, 1
    %s35 = scalar_select %p32, %s33, %s34
    %p38 = pneg %p32
    %p39 = scmp.eq.s32.totalorder %s9, 1
    %p40 = por %p38, %p39
    %p41 = scmp.ne.s32.totalorder %s33, %s36
    %p42 = scmp.eq.s32.totalorder %s9, 0
    %p43 = por %p41, %p42
    %p44 = scmp.ne.s32.totalorder %s33, %s36
    %p45 = scmp.eq.s32.totalorder %s14, 1
    %p46 = por %p44, %p45
    %p47 = scmp.ne.s32.totalorder %s36, %s37
    %p48 = scmp.eq.s32.totalorder %s14, 0
    %p49 = por %p47, %p48
    %p50 = scmp.ne.s32.totalorder %s36, %s37
    %p51 = scmp.eq.s32.totalorder %s15, 1
    %p52 = por %p50, %p51
    %p54 = scmp.ne.s32.totalorder %s37, %s53
    %p55 = scmp.eq.s32.totalorder %s15, 0
    %p56 = por %p54, %p55
    %s58 = sadd.s32 %s57, 1
    %p61 = scmp.eq.s32.totalorder %s9, 1
    %p62 = scmp.ne.s32.totalorder %s57, %s59
    %p63 = scmp.eq.s32.totalorder %s9, 0
    %p64 = por %p62, %p63
    %p65 = scmp.ne.s32.totalorder %s57, %s59
    %p66 = scmp.eq.s32.totalorder %s14, 1
    %p67 = por %p65, %p66
    %p68 = scmp.ne.s32.totalorder %s59, %s60
    %p69 = scmp.eq.s32.totalorder %s14, 0
    %p70 = por %p68, %p69
    %p71 = scmp.ne.s32.totalorder %s59, %s60
    %p72 = scmp.eq.s32.totalorder %s15, 1
    %p73 = por %p71, %p72
    %p75 = scmp.ne.s32.totalorder %s60, %s74
    %p76 = scmp.eq.s32.totalorder %s15, 0
    %p77 = por %p75, %p76
    %s79 = sadd.s32 %s78, 1
    %p82 = scmp.eq.s32.totalorder %s9, 1
    %p83 = scmp.ne.s32.totalorder %s78, %s80
    %p84 = scmp.eq.s32.totalorder %s9, 0
    %p85 = por %p83, %p84
    %p86 = scmp.ne.s32.totalorder %s78, %s80
    %p87 = scmp.eq.s32.totalorder %s14, 1
    %p88 = por %p86, %p87
    %p89 = scmp.ne.s32.totalorder %s80, %s81
    %p90 = scmp.eq.s32.totalorder %s14, 0
    %p91 = por %p89, %p90
    %p92 = scmp.ne.s32.totalorder %s80, %s81
    %p93 = scmp.eq.s32.totalorder %s15, 1
    %p94 = por %p92, %p93
    %p96 = scmp.ne.s32.totalorder %s81, %s95
    %p97 = scmp.eq.s32.totalorder %s15, 0
    %p98 = por %p96, %p97
    %s99 = ssub.s32 %s16, %s28
    %s100 = ssub.s32 %s17, %s24
    %s101 = sor.u32 %s99, %s100
    %p102 = scmp.eq.s32.totalorder %s101, 0
    %s104 = sadd.s32 %s103, 1
    %s105 = scalar_select %p102, %s103, %s104
    %p108 = pneg %p102
    %p109 = scmp.eq.s32.totalorder %s9, 1
    %p110 = por %p108, %p109
    %p111 = scmp.ne.s32.totalorder %s103, %s106
    %p112 = scmp.eq.s32.totalorder %s9, 0
    %p113 = por %p111, %p112
    %p114 = scmp.ne.s32.totalorder %s103, %s106
    %p115 = scmp.eq.s32.totalorder %s14, 1
    %p116 = por %p114, %p115
    %p117 = scmp.ne.s32.totalorder %s106, %s107
    %p118 = scmp.eq.s32.totalorder %s14, 0
    %p119 = por %p117, %p118
    %p120 = scmp.ne.s32.totalorder %s106, %s107
    %p121 = scmp.eq.s32.totalorder %s15, 1
    %p122 = por %p120, %p121
    %p124 = scmp.ne.s32.totalorder %s107, %s123
    %p125 = scmp.eq.s32.totalorder %s15, 0
    %p126 = por %p124, %p125
    %p127 = scmp.le.s32.totalorder 1, %s9
    %p128 = scmp.lt.s32.totalorder %s9, 3
    %p129 = pnand %p127, %p128
    %p130 = pneg %p129
    // Predicated region
    $region9: #{tpu_custom_call.1} parent=5 // pred_check
      _
    $region10: #{tpu_custom_call.1} parent=5 // pred_check_branch
      %132 = sbr.rel (%p129) target = $region12
    $region11: #{tpu_custom_call.1} parent=5 // pred_region
      %s133 = ssub.s32 %s9, 1
      // Predicated region
      $region13: #{tpu_custom_call.1} parent=11 // pred_check
        %p134 = pneg %p70
      $region14: #{tpu_custom_call.1} parent=11 // pred_check_branch
        %136 = sbr.rel (%p134) target = $region16
      $region15: #{tpu_custom_call.1} parent=11 // pred_region
        _
      $region16: #{tpu_custom_call.1} parent=11 // pred_fallthru
        _
      // Predicated region
      $region17: #{tpu_custom_call.1} parent=11 // pred_check
        %p137 = pneg %p91
      $region18: #{tpu_custom_call.1} parent=11 // pred_check_branch
        %139 = sbr.rel (%p137) target = $region20
      $region19: #{tpu_custom_call.1} parent=11 // pred_region
        _
      $region20: #{tpu_custom_call.1} parent=11 // pred_fallthru
        _
    $region12: #{tpu_custom_call.1} parent=5 // pred_fallthru
      _
    %p140 = scmp.lt.s32.totalorder %s9, 2
    // Predicated region
    $region21: #{tpu_custom_call.1} parent=5 // pred_check
      %p141 = pneg %p140
    $region22: #{tpu_custom_call.1} parent=5 // pred_check_branch
      %143 = sbr.rel (%p141) target = $region24
    $region23: #{tpu_custom_call.1} parent=5 // pred_region
      // Predicated region
      $region25: #{tpu_custom_call.1} parent=23 // pred_check
        %p144 = pneg %p43
      $region26: #{tpu_custom_call.1} parent=23 // pred_check_branch
        %146 = sbr.rel (%p144) target = $region28
      $region27: #{tpu_custom_call.1} parent=23 // pred_region
        %p147 = scmp.lt.s32.totalorder %s16, 1
        %s148 = scalar_select %p147, %s16, 1
        %p149 = scmp.lt.s32.totalorder %s17, 0
        %s150 = scalar_select %p149, %s17, 0
        %s151 = smul.addr %s148, 2
        %s152 = sadd.s32 %s150, %s151
        %s153 = smul.addr %s152, 8
        %s154 = scalar_lea.vmem %s0, %s153
      $region28: #{tpu_custom_call.1} parent=23 // pred_fallthru
        _
    $region24: #{tpu_custom_call.1} parent=5 // pred_fallthru
      _
    %p155 = scmp.le.s32.totalorder 1, %s9
    %p156 = scmp.lt.s32.totalorder %s9, 3
    %p157 = pnand %p155, %p156
    %p158 = pneg %p157
    // Predicated region
    $region29: #{tpu_custom_call.1} parent=5 // pred_check
      _
    $region30: #{tpu_custom_call.1} parent=5 // pred_check_branch
      %160 = sbr.rel (%p157) target = $region32
    $region31: #{tpu_custom_call.1} parent=5 // pred_region
      %s161 = ssub.s32 %s9, 1
      %p162 = scmp.lt.s32.totalorder %s18, 1
      %s163 = scalar_select %p162, %s18, 1
      %p164 = scmp.lt.s32.totalorder %s19, 0
      %s165 = scalar_select %p164, %s19, 0
      %s166 = smul.addr %s163, 2
      %s167 = sadd.s32 %s165, %s166
      %s168 = smul.addr %s167, 8
      %s169 = scalar_lea.vmem %s0, %s168
      %p170 = pneg %p49
      %p171 = pneg %p46
      %p172 = pneg %p70
      %p173 = pneg %p67
      %p174 = pneg %p91
      %p175 = pneg %p88
      %p176 = pneg %p119
      %p177 = pneg %p116
      %p178 = scmp.lt.s32.totalorder %s18, 1
      %s179 = scalar_select %p178, %s18, 1
      %p180 = scmp.lt.s32.totalorder %s19, 0
      %s181 = scalar_select %p180, %s19, 0
      %s182 = smul.addr %s179, 3
      %s183 = sadd.s32 %s181, %s182
      %s184 = smul.addr %s183, 8
      %s185 = scalar_lea.vmem %s3, %s184
      %p186 = scmp.lt.s32.totalorder %s18, 1
      %s187 = scalar_select %p186, %s18, 1
      %p188 = scmp.lt.s32.totalorder %s19, 0
      %s189 = scalar_select %p188, %s19, 0
      %s190 = smul.addr %s187, 2
      %s191 = sadd.s32 %s189, %s190
      %s192 = smul.addr %s191, 8
      %s193 = scalar_lea.vmem %s0, %s192
      %p194 = scmp.lt.s32.totalorder %s18, 1
      %s195 = scalar_select %p194, %s18, 1
      %p196 = scmp.lt.s32.totalorder %s19, 0
      %s197 = scalar_select %p196, %s19, 0
      %s198 = smul.addr %s195, 3
      %s199 = sadd.s32 %s197, %s198
      %s200 = smul.addr %s199, 8
      %s201 = scalar_lea.vmem %s3, %s200
      %v202 = vld [vmem:[%s1] sm:$0xff]
      %v203 = vld [vmem:[%s1 + $0x8] sm:$0xff]
      %v204 = vld [vmem:[%s1 + $0x10] sm:$0xf]
      %v205 = vld [vmem:[%s193] sm:$0xff]
      %v206 = vld [vmem:[%s193 + $0x8] sm:$0x3]
      %v207 = vld [vmem:[%s2] sm:$0xff]
      %v208 = vld [vmem:[%s2 + $0x8] sm:$0xff]
      %v209 = vld [vmem:[%s2 + $0x10] sm:$0xf]
      %211 = vset.pattern.permute.xlu0 0
      %212 = vperm.xlu0 %211, %v207
      %v213 = vpop.permute.xlu0 %212
      %216 = vset.pattern.permute.xlu0 0
      %217 = vperm.xlu0 %216, %v208
      %v218 = vpop.permute.xlu0 %217
      %221 = vset.pattern.permute.xlu0 0
      %222 = vperm.xlu0 %221, %v209
      %v223 = vpop.permute.xlu0 %222
      %vm225 = vcmask 80896
      %v227 = vsel %vm225, %v202, 0
      %v230 = vsel %vm225, %v203, 0
      %v233 = vsel %vm225, %v204, 0
      %vm235 = vcmask 1041408
      %v237 = vsel %vm235, %v206, 0
      %239 = vmatprep.subr.mxu0 0.0
      %240 = vmatpush1.msra.mxu0 0.0
      %241 = vmatprep.subr.mxu0 0.0
      %242 = vmatpush1.msra.mxu0 0.0
      %243 = vmatprep.subr.mxu0 0.0
      %244 = vmatpush1.msra.mxu0 0.0
      %245 = vmatprep.subr.mxu0 0.0
      %246 = vmatpush1.msra.mxu0 0.0
      %247 = vmatprep.subr.mxu0 0.0
      %248 = vmatpush1.msra.mxu0 0.0
      %249 = vmatprep.subr.mxu0 0.0
      %250 = vmatpush1.msra.mxu0 0.0
      %251 = vmatprep.subr.mxu0 0.0
      %252 = vmatpush1.msra.mxu0 0.0
      %253 = vmatprep.subr.mxu0 0.0
      %254 = vmatpush1.msra.mxu0 0.0
      %255 = vmatprep.subr.mxu0 0.0
      %256 = vmatpush1.msra.mxu0 0.0
      %257 = vmatprep.subr.mxu0 0.0
      %258 = vmatpush1.msra.mxu0 0.0
      %259 = vmatprep.subr.mxu0 0.0
      %260 = vmatpush1.msra.mxu0 0.0
      %261 = vmatprep.subr.mxu0 0.0
      %262 = vmatpush1.msra.mxu0 0.0
      %263 = vmatprep.subr.mxu0 0.0
      %264 = vmatpush1.msra.mxu0 0.0
      %265 = vmatprep.subr.mxu0 0.0
      %266 = vmatpush1.msra.mxu0 0.0
      %267 = vmatprep.subr.mxu0 0.0
      %268 = vmatpush1.msra.mxu0 %v237
      %269 = vmatprep.subr.mxu0 0.0
      %270 = vmatpush1.msra.mxu0 %v205
      %271 = vmatprep.subr.mxu0 0.0
      %272 = vmatpush2.msra.mxu0 0.0
      %273 = vmatprep.subr.mxu0 0.0
      %274 = vmatpush2.msra.mxu0 0.0
      %275 = vmatprep.subr.mxu0 0.0
      %276 = vmatpush2.msra.mxu0 0.0
      %277 = vmatprep.subr.mxu0 0.0
      %278 = vmatpush2.msra.mxu0 0.0
      %279 = vmatprep.subr.mxu0 0.0
      %280 = vmatpush2.msra.mxu0 0.0
      %281 = vmatprep.subr.mxu0 0.0
      %282 = vmatpush2.msra.mxu0 0.0
      %283 = vmatprep.subr.mxu0 0.0
      %284 = vmatpush2.msra.mxu0 0.0
      %285 = vmatprep.subr.mxu0 0.0
      %286 = vmatpush2.msra.mxu0 0.0
      %287 = vmatprep.subr.mxu0 0.0
      %288 = vmatpush2.msra.mxu0 0.0
      %289 = vmatprep.subr.mxu0 0.0
      %290 = vmatpush2.msra.mxu0 0.0
      %291 = vmatprep.subr.mxu0 0.0
      %292 = vmatpush2.msra.mxu0 0.0
      %293 = vmatprep.subr.mxu0 0.0
      %294 = vmatpush2.msra.mxu0 0.0
      %295 = vmatprep.subr.mxu0 0.0
      %296 = vmatpush2.msra.mxu0 0.0
      %297 = vmatprep.subr.mxu0 0.0
      %298 = vmatpush2.msra.mxu0 0.0
      %299 = vmatprep.subr.mxu0 0.0
      %300 = vmatpush2.msra.mxu0 0.0
      %301 = vmatprep.subr.mxu0 0.0
      %302 = vmatpush2.msra.mxu0 0.0
      %303 = vmatprep.mubr.f32.mxu0 0.0
      %304 = vmatmul.mubr.f32.gmra.mxu0 %v227
      %v305 = vpop.f32.mrf.mxu0
      %v306 = vadd.f32 %v213, %v305
      %v307 = vpop.f32.mrf.mxu0
      %308 = vmatprep.mubr.f32.mxu0 0.0
      %309 = vmatmul.mubr.f32.gmra.mxu0 %v230
      %v310 = vpop.f32.mrf.mxu0
      %v311 = vadd.f32 %v218, %v310
      %v312 = vpop.f32.mrf.mxu0
      %313 = vmatprep.mubr.f32.mxu0 0.0
      %314 = vmatmul.mubr.f32.gmra.mxu0 %v233
      %v315 = vpop.f32.mrf.mxu0
      %v316 = vadd.f32 %v223, %v315
      %v317 = vpop.f32.mrf.mxu0
      %318 = vdwg.mxu0
      %v319 = vmax.f32 %v306, 0.0
      %v320 = vmax.f32 %v311, 0.0
      %v321 = vmax.f32 %v316, 0.0
      %vm322 = vcmask 130048
      %323 = vst.msk [vmem:[%s201] sm:$0xff] %vm322, %v319
      %324 = vst.msk [vmem:[%s201 + $0x8] sm:$0xff] %vm322, %v320
      %vm325 = vcmask 125952
      %326 = vst.msk [vmem:[%s201 + $0x10] sm:$0xf] %vm325, %v321
      %p327 = scmp.lt.s32.totalorder %s18, 1
      %s328 = scalar_select %p327, %s18, 1
      %p329 = scmp.lt.s32.totalorder %s19, 0
      %s330 = scalar_select %p329, %s19, 0
      %s331 = smul.addr %s328, 3
      %s332 = sadd.s32 %s330, %s331
      %s333 = smul.addr %s332, 8
      %s334 = scalar_lea.vmem %s3, %s333
      // Predicated region
      $region33: #{tpu_custom_call.1} parent=31 // pred_check
        %p335 = pneg %p116
      $region34: #{tpu_custom_call.1} parent=31 // pred_check_branch
        %337 = sbr.rel (%p335) target = $region36
      $region35: #{tpu_custom_call.1} parent=31 // pred_region
        _
      $region36: #{tpu_custom_call.1} parent=31 // pred_fallthru
        _
    $region32: #{tpu_custom_call.1} parent=5 // pred_fallthru
      _
    %p338 = scmp.le.s32.totalorder 2, %s9
    // Predicated region
    $region37: #{tpu_custom_call.1} parent=5 // pred_check
      %p339 = pneg %p338
    $region38: #{tpu_custom_call.1} parent=5 // pred_check_branch
      %341 = sbr.rel (%p339) target = $region40
    $region39: #{tpu_custom_call.1} parent=5 // pred_region
      %s342 = ssub.s32 %s9, 2
      // Predicated region
      $region41: #{tpu_custom_call.1} parent=39 // pred_check
        %p343 = pneg %p122
      $region42: #{tpu_custom_call.1} parent=39 // pred_check_branch
        %345 = sbr.rel (%p343) target = $region44
      $region43: #{tpu_custom_call.1} parent=39 // pred_region
        %p346 = scmp.lt.s32.totalorder %s20, 1
        %s347 = scalar_select %p346, %s20, 1
        %p348 = scmp.lt.s32.totalorder %s21, 0
        %s349 = scalar_select %p348, %s21, 0
        %s350 = smul.addr %s347, 3
        %s351 = sadd.s32 %s349, %s350
        %s352 = smul.addr %s351, 8
        %s353 = scalar_lea.vmem %s3, %s352
      $region44: #{tpu_custom_call.1} parent=39 // pred_fallthru
        _
    $region40: #{tpu_custom_call.1} parent=5 // pred_fallthru
      _
  $region6: #{tpu_custom_call.1} parent=0 // loop_footer
    %s13 = sadd.s32 1, %s9
  $region7: #{tpu_custom_call.1} parent=0 // loop_footer_branch
    %8 = sbr.rel target = $region3
  $region8: #{tpu_custom_call.1} parent=0 // loop_exit
    _

</llo_original>
